<compile_context>
chip_gen: v7x
topology: tpu7x:2x2x1
jax: 0.10.0
libtpu: 0.0.40
codegen_flags: <defaults>
</compile_context>

<pallas_src>
import functools

import jax
import jax.numpy as jnp
from jax.experimental import pallas as pl
from jax.experimental.pallas import tpu as pltpu


def _proj_kernel(x_ref, w_ref, b_ref, o_ref):
    """One (E, tile_m) channel-first output block of the patch projection.

    x_ref: (1, K, TM)  bf16/f32 -- streamed im2col columns (tokens)
    w_ref: (E, K)      bf16/f32 -- resident projection weight (torch flatten order)
    b_ref: (E, 1)      f32      -- resident bias
    o_ref: (1, E, TM)           -- channel-first output block
    """
    acc = jnp.dot(w_ref[...], x_ref[0], preferred_element_type=jnp.float32)
    acc = acc + b_ref[...]                      # lane-broadcast bias epilogue (f32)
    o_ref[0] = acc.astype(o_ref.dtype)


def _pick_tile_m(m_per_batch, batch, requested):
    """Token-tile size: lane-dense (multiple of 128) or full axis; keep >= 2
    grid steps when B == 1 so v7x can shard across its 2 TensorCores."""
    requested = max(128, (requested // 128) * 128)
    tile = m_per_batch if m_per_batch <= requested else requested
    if batch == 1 and m_per_batch > 256:
        half = -(-m_per_batch // 2)
        half = -(-half // 128) * 128            # round up to lane multiple
        tile = min(tile, half)
    return tile


@functools.partial(
    jax.jit, static_argnames=("patch_size", "tile_m", "out_dtype", "use_bf16"))
def patch_embed3d_pallas(x, weight, bias, patch_size=(2, 4, 4), *,
                         tile_m=2048, out_dtype=None, use_bf16=True):
    """PatchEmbed3D forward (norm_layer=None).

    x      : [B, C, D, H, W]
    weight : [E, C, pD, pH, pW]   (torch Conv3d layout)
    bias   : [E]
    returns: [B, E, D', H', W']   with D'=ceil(D/pD) etc. (after right-padding)
    """
    B, C, D, H, W = x.shape
    pD, pH, pW = patch_size
    E = weight.shape[0]
    if out_dtype is None:
        out_dtype = x.dtype
    mxu_dtype = jnp.bfloat16 if use_bf16 else jnp.float32

    # ---- pad spatial dims up to patch multiples (matches the F.pad calls) ----
    padD, padH, padW = (-D) % pD, (-H) % pH, (-W) % pW
    if padD or padH or padW:
        x = jnp.pad(x, ((0, 0), (0, 0), (0, padD), (0, padH), (0, padW)))
    Dp, Hp, Wp = D + padD, H + padH, W + padW
    nD, nH, nW = Dp // pD, Hp // pH, Wp // pW

    K = C * pD * pH * pW            # contraction dim, kept UN-padded
    Mpb = nD * nH * nW              # tokens per batch element

    # ---- fused producer: pad + patchify + cast, one HBM write, final layout --
    # patches[b, (c,kd,kh,kw), (d0,h0,w0)]  (K order == torch weight flatten)
    patches = (x.reshape(B, C, nD, pD, nH, pH, nW, pW)
                 .transpose(0, 1, 3, 5, 7, 2, 4, 6)   # [B, C,pD,pH,pW, nD,nH,nW]
                 .reshape(B, K, Mpb)
                 .astype(mxu_dtype))

    w2d = weight.reshape(E, K).astype(mxu_dtype)       # no transpose needed
    b2d = bias.reshape(E, 1).astype(jnp.float32)

    tm = _pick_tile_m(Mpb, B, tile_m)
    grid = (B, pl.cdiv(Mpb, tm))

    cost = pl.CostEstimate(
        flops=2 * B * Mpb * K * E,
        transcendentals=0,
        bytes_accessed=(patches.size * patches.dtype.itemsize
                        + w2d.size * w2d.dtype.itemsize
                        + b2d.size * b2d.dtype.itemsize
                        + B * E * Mpb * jnp.dtype(out_dtype).itemsize),
    )

    out = pl.pallas_call(
        _proj_kernel,
        out_shape=jax.ShapeDtypeStruct((B, E, Mpb), out_dtype),
        grid=grid,
        in_specs=[
            # streamed token blocks (software-pipelined over the grid)
            pl.BlockSpec((1, K, tm), lambda b, i: (b, 0, i)),
            # weight / bias: constant block index -> resident, fetched once
            pl.BlockSpec((E, K), lambda b, i: (0, 0)),
            pl.BlockSpec((E, 1), lambda b, i: (0, 0)),
        ],
        out_specs=pl.BlockSpec((1, E, tm), lambda b, i: (b, 0, i)),
        compiler_params=pltpu.CompilerParams(
            dimension_semantics=("parallel", "parallel"),
            vmem_limit_bytes=32 * 1024 * 1024,
        ),
        cost_estimate=cost,
    )(patches, w2d, b2d)

    # [B, E, Mpb] -> [B, E, D', H', W'] : contiguous reshape, no extra HBM pass
    return out.reshape(B, E, nD, nH, nW)


def _ref_patch_embed(x, weight, bias, patch_size):
    """Plain-JAX f32 reference (stride == kernel Conv3d == im2col matmul)."""
    B, C, D, H, W = x.shape
    pD, pH, pW = patch_size
    E = weight.shape[0]
    padD, padH, padW = (-D) % pD, (-H) % pH, (-W) % pW
    xp = jnp.pad(x, ((0, 0), (0, 0), (0, padD), (0, padH), (0, padW)))
    nD, nH, nW = (D + padD) // pD, (H + padH) // pH, (W + padW) // pW
    K = C * pD * pH * pW
    patches = (xp.reshape(B, C, nD, pD, nH, pH, nW, pW)
                 .transpose(0, 2, 4, 6, 1, 3, 5, 7)
                 .reshape(-1, K))
    out = patches @ weight.reshape(E, K).T + bias
    return out.reshape(B, nD, nH, nW, E).transpose(0, 4, 1, 2, 3)


if __name__ == "__main__":
    key = jax.random.PRNGKey(0)
    kx, kw, kb, kx2 = jax.random.split(key, 4)

    # Small shapes consistent with the module defaults:
    #   in_chans=3, embed_dim=96, patch_size=(2,4,4), video = 2 x 3 x 8 x 16 x 16
    B, C = 2, 3
    D, H, W = 8, 16, 16
    patch_size = (2, 4, 4)
    E = 96

    # torch Conv3d default init: uniform(+-1/sqrt(fan_in)), fan_in = C*pD*pH*pW
    fan_in = C * patch_size[0] * patch_size[1] * patch_size[2]
    lim = 1.0 / (fan_in ** 0.5)
    weight = jax.random.uniform(kw, (E, C) + patch_size,
                                minval=-lim, maxval=lim, dtype=jnp.float32)
    bias = jax.random.uniform(kb, (E,), minval=-lim, maxval=lim,
                              dtype=jnp.float32)

    # Case 1: patch-aligned spatial dims.
    x = jax.random.normal(kx, (B, C, D, H, W), dtype=jnp.float32)
    y = patch_embed3d_pallas(x, weight, bias, patch_size)
    jax.block_until_ready(y)
    ref = _ref_patch_embed(x, weight, bias, patch_size)
    assert y.shape == ref.shape == (B, E, D // 2, H // 4, W // 4), \
        f"bad output shape {y.shape}"
    # bf16 MXU operands with f32 accumulation -> loosened tolerance vs f32 ref.
    assert jnp.allclose(y, ref, atol=2e-2, rtol=2e-2), "mismatch vs reference"

    # Case 2: non-multiple spatial dims exercise the F.pad-equivalent path.
    x2 = jax.random.normal(kx2, (B, C, 7, 15, 14), dtype=jnp.float32)
    y2 = patch_embed3d_pallas(x2, weight, bias, patch_size)
    jax.block_until_ready(y2)
    ref2 = _ref_patch_embed(x2, weight, bias, patch_size)
    assert y2.shape == ref2.shape == (B, E, 4, 4, 4), f"bad output shape {y2.shape}"
    assert jnp.allclose(y2, ref2, atol=2e-2, rtol=2e-2), "mismatch vs reference (padded)"

    print("KERNEL_OK")
</pallas_src>

<mosaic_0001>
module attributes {stable_mosaic.version = 11 : i64} {
  func.func @_proj_kernel(%arg0: i32, %arg1: i32, %arg2: memref<1x96x64xbf16, #tpu.memory_space<vmem>>, %arg3: memref<96x96xbf16, #tpu.memory_space<vmem>>, %arg4: memref<96x1xf32, #tpu.memory_space<vmem>>, %arg5: memref<1x96x64xf32, #tpu.memory_space<vmem>>) attributes {dimension_semantics = [#tpu.dimension_semantics<parallel>, #tpu.dimension_semantics<parallel>], iteration_bounds = array<i64: 2, 1>, scalar_prefetch = 0 : i64, scratch_operands = 0 : i64, tpu.core_type = #tpu.core_type<tc>, window_params = [{transform_indices = @transform_0, window_bounds = array<i64: 1, 96, 64>}, {pipeline_mode = #tpu.pipeline_mode<synchronous>, transform_indices = @transform_1, window_bounds = array<i64: 96, 96>}, {pipeline_mode = #tpu.pipeline_mode<synchronous>, transform_indices = @transform_2, window_bounds = array<i64: 96, 1>}, {transform_indices = @transform_3, window_bounds = array<i64: 1, 96, 64>}]} {
    %c0 = arith.constant 0 : index
    %c0_0 = arith.constant 0 : index
    %0 = vector.load %arg3[%c0, %c0_0] : memref<96x96xbf16, #tpu.memory_space<vmem>>, vector<96x96xbf16>
    %c0_1 = arith.constant 0 : index
    %c0_2 = arith.constant 0 : index
    %c0_3 = arith.constant 0 : index
    %1 = vector.load %arg2[%c0_1, %c0_2, %c0_3] : memref<1x96x64xbf16, #tpu.memory_space<vmem>>, vector<1x96x64xbf16>
    %2 = vector.shape_cast %1 : vector<1x96x64xbf16> to vector<96x64xbf16>
    %cst = arith.constant dense<0.000000e+00> : vector<96x64xf32>
    %3 = tpu.matmul %0, %2, %cst {dimension_numbers = #tpu.dot_dimension_numbers<[1], [0], [0], [1], [0, 0, 1, 1], [], []>} : vector<96x96xbf16>, vector<96x64xbf16>, vector<96x64xf32> -> vector<96x64xf32>
    %c0_4 = arith.constant 0 : index
    %c0_5 = arith.constant 0 : index
    %4 = vector.load %arg4[%c0_4, %c0_5] : memref<96x1xf32, #tpu.memory_space<vmem>>, vector<96x1xf32>
    %5 = vector.broadcast %4 : vector<96x1xf32> to vector<96x64xf32>
    %6 = arith.addf %3, %5 : vector<96x64xf32>
    %c0_6 = arith.constant 0 : index
    %c0_7 = arith.constant 0 : index
    %c0_8 = arith.constant 0 : index
    %7 = vector.load %arg5[%c0_6, %c0_7, %c0_8] : memref<1x96x64xf32, #tpu.memory_space<vmem>>, vector<1x96x64xf32>
    %8 = vector.shape_cast %7 : vector<1x96x64xf32> to vector<96x64xf32>
    %9 = vector.shape_cast %6 : vector<96x64xf32> to vector<1x96x64xf32>
    tpu.vector_store %arg5[%c0_6, %c0_7, %c0_8], %9 {strides = array<i32>} : memref<1x96x64xf32, #tpu.memory_space<vmem>>, vector<1x96x64xf32>,
    return
  }
  func.func @transform_0(%arg0: i32, %arg1: i32) -> (i32, i32, i32) {
    %c0_i32 = arith.constant 0 : i32
    %c0_i32_0 = arith.constant 0 : i32
    return %arg0, %c0_i32, %arg1 : i32, i32, i32
  }
  func.func @transform_1(%arg0: i32, %arg1: i32) -> (i32, i32) {
    %c0_i32 = arith.constant 0 : i32
    %c0_i32_0 = arith.constant 0 : i32
    %c0_i32_1 = arith.constant 0 : i32
    return %c0_i32, %c0_i32_0 : i32, i32
  }
  func.func @transform_2(%arg0: i32, %arg1: i32) -> (i32, i32) {
    %c0_i32 = arith.constant 0 : i32
    %c0_i32_0 = arith.constant 0 : i32
    %c0_i32_1 = arith.constant 0 : i32
    return %c0_i32, %c0_i32_0 : i32, i32
  }
  func.func @transform_3(%arg0: i32, %arg1: i32) -> (i32, i32, i32) {
    %c0_i32 = arith.constant 0 : i32
    %c0_i32_0 = arith.constant 0 : i32
    return %arg0, %c0_i32, %arg1 : i32, i32, i32
  }
}

</mosaic_0001>

<llo_original>
// kernel: patch_embed3d_pallas.1
$region0: #{patch_embed3d_pallas.1}
  #allocation0 [shape = 'u32[]', space=smem, size = 0x4, offset = 0x4, fixed_abs, tag = 'smem constant byte address 0x4 - core index']
  #allocation1 [shape = 'u32[144,128]{1,0:T(1,128)}', space=vmem, size = 0x12000, scoped, tag = 'internal scratch']
  %s0 = inlined_call_operand.vmem [shape: bf16[2,96,64], index: 0, kind: input, shape index: {}]
  %s1 = inlined_call_operand.vmem [shape: bf16[96,96], index: 1, kind: input, shape index: {}]
  %s2 = inlined_call_operand.vmem [shape: f32[96,1], index: 2, kind: input, shape index: {}]
  %s3 = inlined_call_operand.vmem [shape: f32[2,96,64], index: 3, kind: output, shape index: {}]
  %s4 = sld [smem:[#allocation0]]
  $region45: #{patch_embed3d_pallas.1} parent=0
    _
  %s6 = ssub.s32 1, %s4
  %s7 = scalar_select 0, %s6, %s4
  loop: start=0, step=1, limit=4
  $region2: #{patch_embed3d_pallas.1} parent=0 // loop_pre_header
    _
  $region3: #{patch_embed3d_pallas.1} parent=0 // loop_header
    %s9 = sphi 0, %s13
    %p10 = scmp.ge.s32.totalorder %s9, 4
    %s16 = sphi 0, %s28
    %s17 = sphi 0, %s24
    %s18 = sphi 0, %s16
    %s19 = sphi 0, %s17
    %s20 = sphi 0, %s18
    %s21 = sphi 0, %s19
    %s33 = sphi 0, %s35
    %s36 = sphi 0, %s33
    %s37 = sphi 0, %s36
    %s53 = sphi 0, %s37
    %s57 = sphi 0, %s57
    %s59 = sphi 0, %s57
    %s60 = sphi 0, %s59
    %s74 = sphi 0, %s60
    %s78 = sphi 0, %s78
    %s80 = sphi 0, %s78
    %s81 = sphi 0, %s80
    %s95 = sphi 0, %s81
    %s103 = sphi 0, %s105
    %s106 = sphi 0, %s103
    %s107 = sphi 0, %s106
    %s123 = sphi 0, %s107
  $region4: #{patch_embed3d_pallas.1} parent=0 // loop_header_branch
    %12 = sbr.rel (%p10) target = $region8
  $region5: #{patch_embed3d_pallas.1} parent=0 // loop_body
    %s14 = ssub.s32 %s9, 1
    %s15 = ssub.s32 %s9, 2
    %s22 = sadd.s32 1, %s17
    %p23 = scmp.ge.s32.totalorder %s22, 1
    %s24 = scalar_select %p23, 0, %s22
    %s25 = sadd.s32 1, %s16
    %s26 = scalar_select %p23, %s25, %s16
    %p27 = scmp.ge.s32.totalorder %s26, 2
    %s28 = scalar_select %p27, 0, %s26
    %s29 = ssub.s32 %s16, %s28
    %s30 = ssub.s32 %s17, %s24
    %s31 = sor.u32 %s29, %s30
    %p32 = scmp.eq.s32.totalorder %s31, 0
    %s34 = sadd.s32 %s33, 1
    %s35 = scalar_select %p32, %s33, %s34
    %p38 = pneg %p32
    %p39 = scmp.eq.s32.totalorder %s9, 1
    %p40 = por %p38, %p39
    %p41 = scmp.ne.s32.totalorder %s33, %s36
    %p42 = scmp.eq.s32.totalorder %s9, 0
    %p43 = por %p41, %p42
    %p44 = scmp.ne.s32.totalorder %s33, %s36
    %p45 = scmp.eq.s32.totalorder %s14, 1
    %p46 = por %p44, %p45
    %p47 = scmp.ne.s32.totalorder %s36, %s37
    %p48 = scmp.eq.s32.totalorder %s14, 0
    %p49 = por %p47, %p48
    %p50 = scmp.ne.s32.totalorder %s36, %s37
    %p51 = scmp.eq.s32.totalorder %s15, 1
    %p52 = por %p50, %p51
    %p54 = scmp.ne.s32.totalorder %s37, %s53
    %p55 = scmp.eq.s32.totalorder %s15, 0
    %p56 = por %p54, %p55
    %s58 = sadd.s32 %s57, 1
    %p61 = scmp.eq.s32.totalorder %s9, 1
    %p62 = scmp.ne.s32.totalorder %s57, %s59
    %p63 = scmp.eq.s32.totalorder %s9, 0
    %p64 = por %p62, %p63
    %p65 = scmp.ne.s32.totalorder %s57, %s59
    %p66 = scmp.eq.s32.totalorder %s14, 1
    %p67 = por %p65, %p66
    %p68 = scmp.ne.s32.totalorder %s59, %s60
    %p69 = scmp.eq.s32.totalorder %s14, 0
    %p70 = por %p68, %p69
    %p71 = scmp.ne.s32.totalorder %s59, %s60
    %p72 = scmp.eq.s32.totalorder %s15, 1
    %p73 = por %p71, %p72
    %p75 = scmp.ne.s32.totalorder %s60, %s74
    %p76 = scmp.eq.s32.totalorder %s15, 0
    %p77 = por %p75, %p76
    %s79 = sadd.s32 %s78, 1
    %p82 = scmp.eq.s32.totalorder %s9, 1
    %p83 = scmp.ne.s32.totalorder %s78, %s80
    %p84 = scmp.eq.s32.totalorder %s9, 0
    %p85 = por %p83, %p84
    %p86 = scmp.ne.s32.totalorder %s78, %s80
    %p87 = scmp.eq.s32.totalorder %s14, 1
    %p88 = por %p86, %p87
    %p89 = scmp.ne.s32.totalorder %s80, %s81
    %p90 = scmp.eq.s32.totalorder %s14, 0
    %p91 = por %p89, %p90
    %p92 = scmp.ne.s32.totalorder %s80, %s81
    %p93 = scmp.eq.s32.totalorder %s15, 1
    %p94 = por %p92, %p93
    %p96 = scmp.ne.s32.totalorder %s81, %s95
    %p97 = scmp.eq.s32.totalorder %s15, 0
    %p98 = por %p96, %p97
    %s99 = ssub.s32 %s16, %s28
    %s100 = ssub.s32 %s17, %s24
    %s101 = sor.u32 %s99, %s100
    %p102 = scmp.eq.s32.totalorder %s101, 0
    %s104 = sadd.s32 %s103, 1
    %s105 = scalar_select %p102, %s103, %s104
    %p108 = pneg %p102
    %p109 = scmp.eq.s32.totalorder %s9, 1
    %p110 = por %p108, %p109
    %p111 = scmp.ne.s32.totalorder %s103, %s106
    %p112 = scmp.eq.s32.totalorder %s9, 0
    %p113 = por %p111, %p112
    %p114 = scmp.ne.s32.totalorder %s103, %s106
    %p115 = scmp.eq.s32.totalorder %s14, 1
    %p116 = por %p114, %p115
    %p117 = scmp.ne.s32.totalorder %s106, %s107
    %p118 = scmp.eq.s32.totalorder %s14, 0
    %p119 = por %p117, %p118
    %p120 = scmp.ne.s32.totalorder %s106, %s107
    %p121 = scmp.eq.s32.totalorder %s15, 1
    %p122 = por %p120, %p121
    %p124 = scmp.ne.s32.totalorder %s107, %s123
    %p125 = scmp.eq.s32.totalorder %s15, 0
    %p126 = por %p124, %p125
    %p127 = scmp.le.s32.totalorder 1, %s9
    %p128 = scmp.lt.s32.totalorder %s9, 3
    %p129 = pnand %p127, %p128
    %p130 = pneg %p129
    // Predicated region
    $region9: #{patch_embed3d_pallas.1} parent=5 // pred_check
      _
    $region10: #{patch_embed3d_pallas.1} parent=5 // pred_check_branch
      %132 = sbr.rel (%p129) target = $region12
    $region11: #{patch_embed3d_pallas.1} parent=5 // pred_region
      %s133 = ssub.s32 %s9, 1
      // Predicated region
      $region13: #{patch_embed3d_pallas.1} parent=11 // pred_check
        %p134 = pneg %p70
      $region14: #{patch_embed3d_pallas.1} parent=11 // pred_check_branch
        %136 = sbr.rel (%p134) target = $region16
      $region15: #{patch_embed3d_pallas.1} parent=11 // pred_region
        _
      $region16: #{patch_embed3d_pallas.1} parent=11 // pred_fallthru
        _
      // Predicated region
      $region17: #{patch_embed3d_pallas.1} parent=11 // pred_check
        %p137 = pneg %p91
      $region18: #{patch_embed3d_pallas.1} parent=11 // pred_check_branch
        %139 = sbr.rel (%p137) target = $region20
      $region19: #{patch_embed3d_pallas.1} parent=11 // pred_region
        _
      $region20: #{patch_embed3d_pallas.1} parent=11 // pred_fallthru
        _
    $region12: #{patch_embed3d_pallas.1} parent=5 // pred_fallthru
      _
    %p140 = scmp.lt.s32.totalorder %s9, 2
    // Predicated region
    $region21: #{patch_embed3d_pallas.1} parent=5 // pred_check
      %p141 = pneg %p140
    $region22: #{patch_embed3d_pallas.1} parent=5 // pred_check_branch
      %143 = sbr.rel (%p141) target = $region24
    $region23: #{patch_embed3d_pallas.1} parent=5 // pred_region
      // Predicated region
      $region25: #{patch_embed3d_pallas.1} parent=23 // pred_check
        %p144 = pneg %p43
      $region26: #{patch_embed3d_pallas.1} parent=23 // pred_check_branch
        %146 = sbr.rel (%p144) target = $region28
      $region27: #{patch_embed3d_pallas.1} parent=23 // pred_region
        %p147 = scmp.lt.s32.totalorder %s16, 1
        %s148 = scalar_select %p147, %s16, 1
        %p149 = scmp.lt.s32.totalorder %s17, 0
        %s150 = scalar_select %p149, %s17, 0
        %s151 = smul.addr %s148, 12
        %s152 = sadd.s32 %s150, %s151
        %s153 = smul.addr %s152, 4
        %s154 = scalar_lea.vmem %s0, %s153
      $region28: #{patch_embed3d_pallas.1} parent=23 // pred_fallthru
        _
    $region24: #{patch_embed3d_pallas.1} parent=5 // pred_fallthru
      _
    %p155 = scmp.le.s32.totalorder 1, %s9
    %p156 = scmp.lt.s32.totalorder %s9, 3
    %p157 = pnand %p155, %p156
    %p158 = pneg %p157
    // Predicated region
    $region29: #{patch_embed3d_pallas.1} parent=5 // pred_check
      _
    $region30: #{patch_embed3d_pallas.1} parent=5 // pred_check_branch
      %160 = sbr.rel (%p157) target = $region32
    $region31: #{patch_embed3d_pallas.1} parent=5 // pred_region
      %s161 = ssub.s32 %s9, 1
      %p162 = scmp.lt.s32.totalorder %s18, 1
      %s163 = scalar_select %p162, %s18, 1
      %p164 = scmp.lt.s32.totalorder %s19, 0
      %s165 = scalar_select %p164, %s19, 0
      %s166 = smul.addr %s163, 12
      %s167 = sadd.s32 %s165, %s166
      %s168 = smul.addr %s167, 4
      %s169 = scalar_lea.vmem %s0, %s168
      %p170 = pneg %p49
      %p171 = pneg %p46
      %p172 = pneg %p70
      %p173 = pneg %p67
      %p174 = pneg %p91
      %p175 = pneg %p88
      %p176 = pneg %p119
      %p177 = pneg %p116
      %p178 = scmp.lt.s32.totalorder %s18, 1
      %s179 = scalar_select %p178, %s18, 1
      %p180 = scmp.lt.s32.totalorder %s19, 0
      %s181 = scalar_select %p180, %s19, 0
      %s182 = smul.addr %s179, 12
      %s183 = sadd.s32 %s181, %s182
      %s184 = smul.addr %s183, 8
      %s185 = scalar_lea.vmem %s3, %s184
      %p186 = scmp.lt.s32.totalorder %s18, 1
      %s187 = scalar_select %p186, %s18, 1
      %p188 = scmp.lt.s32.totalorder %s19, 0
      %s189 = scalar_select %p188, %s19, 0
      %s190 = smul.addr %s187, 12
      %s191 = sadd.s32 %s189, %s190
      %s192 = smul.addr %s191, 4
      %s193 = scalar_lea.vmem %s0, %s192
      %p194 = scmp.lt.s32.totalorder %s18, 1
      %s195 = scalar_select %p194, %s18, 1
      %p196 = scmp.lt.s32.totalorder %s19, 0
      %s197 = scalar_select %p196, %s19, 0
      %s198 = smul.addr %s195, 12
      %s199 = sadd.s32 %s197, %s198
      %s200 = smul.addr %s199, 8
      %s201 = scalar_lea.vmem %s3, %s200
      %v203 = vld [vmem:[%s1] sm:$0xf]
      %v204 = vld [vmem:[%s1 + $0x4] sm:$0xf]
      %v205 = vld [vmem:[%s1 + $0x8] sm:$0xf]
      %v206 = vld [vmem:[%s1 + $0xc] sm:$0xf]
      %v207 = vld [vmem:[%s1 + $0x10] sm:$0xf]
      %v208 = vld [vmem:[%s1 + $0x14] sm:$0xf]
      %v209 = vld [vmem:[%s1 + $0x18] sm:$0xf]
      %v210 = vld [vmem:[%s1 + $0x1c] sm:$0xf]
      %v211 = vld [vmem:[%s1 + $0x20] sm:$0xf]
      %v212 = vld [vmem:[%s1 + $0x24] sm:$0xf]
      %v213 = vld [vmem:[%s1 + $0x28] sm:$0xf]
      %v214 = vld [vmem:[%s1 + $0x2c] sm:$0xf]
      %v215 = vld [vmem:[%s193] sm:$0xf]
      %v216 = vld [vmem:[%s193 + $0x4] sm:$0xf]
      %v217 = vld [vmem:[%s193 + $0x8] sm:$0xf]
      %v218 = vld [vmem:[%s193 + $0xc] sm:$0xf]
      %v219 = vld [vmem:[%s193 + $0x10] sm:$0xf]
      %v220 = vld [vmem:[%s193 + $0x14] sm:$0xf]
      %v221 = vld [vmem:[%s193 + $0x18] sm:$0xf]
      %v222 = vld [vmem:[%s193 + $0x1c] sm:$0xf]
      %v223 = vld [vmem:[%s193 + $0x20] sm:$0xf]
      %v224 = vld [vmem:[%s193 + $0x24] sm:$0xf]
      %v225 = vld [vmem:[%s193 + $0x28] sm:$0xf]
      %v226 = vld [vmem:[%s193 + $0x2c] sm:$0xf]
      %v227 = vld [vmem:[%s2] sm:$0xff]
      %v228 = vld [vmem:[%s2 + $0x8] sm:$0xff]
      %v229 = vld [vmem:[%s2 + $0x10] sm:$0xff]
      %v230 = vld [vmem:[%s2 + $0x18] sm:$0xff]
      %v231 = vld [vmem:[%s2 + $0x20] sm:$0xff]
      %v232 = vld [vmem:[%s2 + $0x28] sm:$0xff]
      %v233 = vld [vmem:[%s2 + $0x30] sm:$0xff]
      %v234 = vld [vmem:[%s2 + $0x38] sm:$0xff]
      %v235 = vld [vmem:[%s2 + $0x40] sm:$0xff]
      %v236 = vld [vmem:[%s2 + $0x48] sm:$0xff]
      %v237 = vld [vmem:[%s2 + $0x50] sm:$0xff]
      %v238 = vld [vmem:[%s2 + $0x58] sm:$0xff]
      %240 = vset.pattern.permute.xlu0 0
      %241 = vperm.xlu0 %240, %v227
      %v242 = vpop.permute.xlu0 %241
      %245 = vset.pattern.permute.xlu0 0
      %246 = vperm.xlu0 %245, %v228
      %v247 = vpop.permute.xlu0 %246
      %250 = vset.pattern.permute.xlu0 0
      %251 = vperm.xlu0 %250, %v229
      %v252 = vpop.permute.xlu0 %251
      %255 = vset.pattern.permute.xlu0 0
      %256 = vperm.xlu0 %255, %v230
      %v257 = vpop.permute.xlu0 %256
      %260 = vset.pattern.permute.xlu0 0
      %261 = vperm.xlu0 %260, %v231
      %v262 = vpop.permute.xlu0 %261
      %265 = vset.pattern.permute.xlu0 0
      %266 = vperm.xlu0 %265, %v232
      %v267 = vpop.permute.xlu0 %266
      %270 = vset.pattern.permute.xlu0 0
      %271 = vperm.xlu0 %270, %v233
      %v272 = vpop.permute.xlu0 %271
      %275 = vset.pattern.permute.xlu0 0
      %276 = vperm.xlu0 %275, %v234
      %v277 = vpop.permute.xlu0 %276
      %280 = vset.pattern.permute.xlu0 0
      %281 = vperm.xlu0 %280, %v235
      %v282 = vpop.permute.xlu0 %281
      %285 = vset.pattern.permute.xlu0 0
      %286 = vperm.xlu0 %285, %v236
      %v287 = vpop.permute.xlu0 %286
      %290 = vset.pattern.permute.xlu0 0
      %291 = vperm.xlu0 %290, %v237
      %v292 = vpop.permute.xlu0 %291
      %295 = vset.pattern.permute.xlu0 0
      %296 = vperm.xlu0 %295, %v238
      %v297 = vpop.permute.xlu0 %296
      %v311 = vunpack.c.l.b16 %v203
      %v312 = vunpack.c.l.b16 %v204
      %v313 = vunpack.c.l.b16 %v205
      %v314 = vunpack.c.l.b16 %v206
      %v315 = vunpack.c.l.b16 %v207
      %v316 = vunpack.c.l.b16 %v208
      %v317 = vunpack.c.l.b16 %v209
      %v318 = vunpack.c.l.b16 %v210
      %v319 = vunpack.c.l.b16 %v211
      %v320 = vunpack.c.l.b16 %v212
      %v321 = vunpack.c.l.b16 %v213
      %v322 = vunpack.c.l.b16 %v214
      %v323 = vpack.c.b16 %v312, %v311
      %v324 = vpack.c.b16 %v314, %v313
      %v325 = vpack.c.b16 %v316, %v315
      %v326 = vpack.c.b16 %v318, %v317
      %v327 = vpack.c.b16 %v320, %v319
      %v328 = vpack.c.b16 %v322, %v321
      %v341 = vunpack.c.l.b16 %v215
      %v342 = vunpack.c.l.b16 %v216
      %v343 = vunpack.c.l.b16 %v217
      %v344 = vunpack.c.l.b16 %v218
      %v345 = vunpack.c.l.b16 %v219
      %v346 = vunpack.c.l.b16 %v220
      %v347 = vunpack.c.l.b16 %v221
      %v348 = vunpack.c.l.b16 %v222
      %v349 = vunpack.c.l.b16 %v223
      %v350 = vunpack.c.l.b16 %v224
      %v351 = vunpack.c.l.b16 %v225
      %v352 = vunpack.c.l.b16 %v226
      %v353 = vpack.c.b16 %v342, %v341
      %v354 = vpack.c.b16 %v344, %v343
      %v355 = vpack.c.b16 %v346, %v345
      %v356 = vpack.c.b16 %v348, %v347
      %v357 = vpack.c.b16 %v350, %v349
      %v358 = vpack.c.b16 %v352, %v351
      %vm365 = vcmask 785408
      %v367 = vsel %vm365, %v323, 0
      %v370 = vsel %vm365, %v324, 0
      %v373 = vsel %vm365, %v325, 0
      %v376 = vsel %vm365, %v326, 0
      %v379 = vsel %vm365, %v327, 0
      %v382 = vsel %vm365, %v328, 0
      %384 = vmatprep.subr.bf16.mxu0 0
      %385 = vmatpush1.bf16.msra.mxu0 %v353
      %386 = vmatprep.subr.bf16.mxu0 0
      %387 = vmatpush1.bf16.msra.mxu0 %v354
      %388 = vmatprep.subr.bf16.mxu0 0
      %389 = vmatpush1.bf16.msra.mxu0 %v355
      %390 = vmatprep.subr.bf16.mxu0 0
      %391 = vmatpush1.bf16.msra.mxu0 %v356
      %392 = vmatprep.subr.bf16.mxu0 0
      %393 = vmatpush1.bf16.msra.mxu0 %v357
      %394 = vmatprep.subr.bf16.mxu0 0
      %395 = vmatpush1.bf16.msra.mxu0 %v358
      %396 = vmatprep.subr.bf16.mxu0 0
      %397 = vmatpush1.bf16.msra.mxu0 0
      %398 = vmatprep.subr.bf16.mxu0 0
      %399 = vmatpush1.bf16.msra.mxu0 0
      %400 = vmatprep.subr.bf16.mxu0 0
      %401 = vmatpush1.bf16.msra.mxu0 0
      %402 = vmatprep.subr.bf16.mxu0 0
      %403 = vmatpush1.bf16.msra.mxu0 0
      %404 = vmatprep.subr.bf16.mxu0 0
      %405 = vmatpush1.bf16.msra.mxu0 0
      %406 = vmatprep.subr.bf16.mxu0 0
      %407 = vmatpush1.bf16.msra.mxu0 0
      %408 = vmatprep.subr.bf16.mxu0 0
      %409 = vmatpush1.bf16.msra.mxu0 0
      %410 = vmatprep.subr.bf16.mxu0 0
      %411 = vmatpush1.bf16.msra.mxu0 0
      %412 = vmatprep.subr.bf16.mxu0 0
      %413 = vmatpush1.bf16.msra.mxu0 0
      %414 = vmatprep.subr.bf16.mxu0 0
      %415 = vmatpush1.bf16.msra.mxu0 0
      %416 = vmatprep.mubr.bf16.mxu0 0
      %417 = vmatmul.mubr.bf16.gmra.mrb[0].mxu0 %v367
      %v418 = vpop.f32.mrb[0].mxu0
      %v419 = vadd.f32 %v242, %v418
      %v420 = vpop.f32.mrb[0].mxu0
      %v421 = vpop.f32.mrb[0].mxu0
      %v422 = vadd.f32 %v247, %v421
      %v423 = vpop.f32.mrb[0].mxu0
      %424 = vmatprep.mubr.bf16.mxu0 0
      %425 = vmatmul.mubr.bf16.gmra.mrb[0].mxu0 %v370
      %v426 = vpop.f32.mrb[0].mxu0
      %v427 = vadd.f32 %v252, %v426
      %v428 = vpop.f32.mrb[0].mxu0
      %v429 = vpop.f32.mrb[0].mxu0
      %v430 = vadd.f32 %v257, %v429
      %v431 = vpop.f32.mrb[0].mxu0
      %432 = vmatprep.mubr.bf16.mxu0 0
      %433 = vmatmul.mubr.bf16.gmra.mrb[0].mxu0 %v373
      %v434 = vpop.f32.mrb[0].mxu0
      %v435 = vadd.f32 %v262, %v434
      %v436 = vpop.f32.mrb[0].mxu0
      %v437 = vpop.f32.mrb[0].mxu0
      %v438 = vadd.f32 %v267, %v437
      %v439 = vpop.f32.mrb[0].mxu0
      %440 = vmatprep.mubr.bf16.mxu0 0
      %441 = vmatmul.mubr.bf16.gmra.mrb[0].mxu0 %v376
      %v442 = vpop.f32.mrb[0].mxu0
      %v443 = vadd.f32 %v272, %v442
      %v444 = vpop.f32.mrb[0].mxu0
      %v445 = vpop.f32.mrb[0].mxu0
      %v446 = vadd.f32 %v277, %v445
      %v447 = vpop.f32.mrb[0].mxu0
      %448 = vmatprep.mubr.bf16.mxu0 0
      %449 = vmatmul.mubr.bf16.gmra.mrb[0].mxu0 %v379
      %v450 = vpop.f32.mrb[0].mxu0
      %v451 = vadd.f32 %v282, %v450
      %v452 = vpop.f32.mrb[0].mxu0
      %v453 = vpop.f32.mrb[0].mxu0
      %v454 = vadd.f32 %v287, %v453
      %v455 = vpop.f32.mrb[0].mxu0
      %456 = vmatprep.mubr.bf16.mxu0 0
      %457 = vmatmul.mubr.bf16.gmra.mrb[0].mxu0 %v382
      %v458 = vpop.f32.mrb[0].mxu0
      %v459 = vadd.f32 %v292, %v458
      %v460 = vpop.f32.mrb[0].mxu0
      %v461 = vpop.f32.mrb[0].mxu0
      %v462 = vadd.f32 %v297, %v461
      %v463 = vpop.f32.mrb[0].mxu0
      %464 = vdwg.mxu0
      %vm465 = vcmask 523264
      %466 = vst.msk [vmem:[%s201] sm:$0xff] %vm465, %v419
      %467 = vst.msk [vmem:[%s201 + $0x8] sm:$0xff] %vm465, %v422
      %468 = vst.msk [vmem:[%s201 + $0x10] sm:$0xff] %vm465, %v427
      %469 = vst.msk [vmem:[%s201 + $0x18] sm:$0xff] %vm465, %v430
      %470 = vst.msk [vmem:[%s201 + $0x20] sm:$0xff] %vm465, %v435
      %471 = vst.msk [vmem:[%s201 + $0x28] sm:$0xff] %vm465, %v438
      %472 = vst.msk [vmem:[%s201 + $0x30] sm:$0xff] %vm465, %v443
      %473 = vst.msk [vmem:[%s201 + $0x38] sm:$0xff] %vm465, %v446
      %474 = vst.msk [vmem:[%s201 + $0x40] sm:$0xff] %vm465, %v451
      %475 = vst.msk [vmem:[%s201 + $0x48] sm:$0xff] %vm465, %v454
      %476 = vst.msk [vmem:[%s201 + $0x50] sm:$0xff] %vm465, %v459
      %477 = vst.msk [vmem:[%s201 + $0x58] sm:$0xff] %vm465, %v462
      %p478 = scmp.lt.s32.totalorder %s18, 1
      %s479 = scalar_select %p478, %s18, 1
      %p480 = scmp.lt.s32.totalorder %s19, 0
      %s481 = scalar_select %p480, %s19, 0
      %s482 = smul.addr %s479, 12
      %s483 = sadd.s32 %s481, %s482
      %s484 = smul.addr %s483, 8
      %s485 = scalar_lea.vmem %s3, %s484
      // Predicated region
      $region33: #{patch_embed3d_pallas.1} parent=31 // pred_check
        %p486 = pneg %p116
      $region34: #{patch_embed3d_pallas.1} parent=31 // pred_check_branch
        %488 = sbr.rel (%p486) target = $region36
      $region35: #{patch_embed3d_pallas.1} parent=31 // pred_region
        _
      $region36: #{patch_embed3d_pallas.1} parent=31 // pred_fallthru
        _
    $region32: #{patch_embed3d_pallas.1} parent=5 // pred_fallthru
      _
    %p489 = scmp.le.s32.totalorder 2, %s9
    // Predicated region
    $region37: #{patch_embed3d_pallas.1} parent=5 // pred_check
      %p490 = pneg %p489
    $region38: #{patch_embed3d_pallas.1} parent=5 // pred_check_branch
      %492 = sbr.rel (%p490) target = $region40
    $region39: #{patch_embed3d_pallas.1} parent=5 // pred_region
      %s493 = ssub.s32 %s9, 2
      // Predicated region
      $region41: #{patch_embed3d_pallas.1} parent=39 // pred_check
        %p494 = pneg %p122
      $region42: #{patch_embed3d_pallas.1} parent=39 // pred_check_branch
        %496 = sbr.rel (%p494) target = $region44
      $region43: #{patch_embed3d_pallas.1} parent=39 // pred_region
        %p497 = scmp.lt.s32.totalorder %s20, 1
        %s498 = scalar_select %p497, %s20, 1
        %p499 = scmp.lt.s32.totalorder %s21, 0
        %s500 = scalar_select %p499, %s21, 0
        %s501 = smul.addr %s498, 12
        %s502 = sadd.s32 %s500, %s501
        %s503 = smul.addr %s502, 8
        %s504 = scalar_lea.vmem %s3, %s503
      $region44: #{patch_embed3d_pallas.1} parent=39 // pred_fallthru
        _
    $region40: #{patch_embed3d_pallas.1} parent=5 // pred_fallthru
      _
  $region6: #{patch_embed3d_pallas.1} parent=0 // loop_footer
    %s13 = sadd.s32 1, %s9
  $region7: #{patch_embed3d_pallas.1} parent=0 // loop_footer_branch
    %8 = sbr.rel target = $region3
  $region8: #{patch_embed3d_pallas.1} parent=0 // loop_exit
    _

</llo_original>
